<compile_context>
chip_gen: v6e
topology: v6e:2x2x1
jax: 0.10.0
libtpu: 0.0.40
codegen_flags: <defaults>
</compile_context>

<pallas_src>
import math
from functools import partial

import jax
import jax.numpy as jnp
from jax.experimental import pallas as pl
from jax.experimental.pallas import tpu as pltpu

_CP = pltpu.CompilerParams
_HAS_RECIP = hasattr(pl, "reciprocal")
_LN_EPS = 1e-5          # torch.nn.LayerNorm default
_BN_EPS = 1e-5          # torch.nn.BatchNorm1d default
_ACT_DTYPE = jnp.bfloat16   # inter-sublayer residual stream dtype
_SUBLANE = 16           # bf16 sublane packing -> pad / tile time in multiples of 16


# ---------------------------------------------------------------------------
# generation-aware VMEM budget + time-tile cap
# ---------------------------------------------------------------------------
def _detect_vmem_capacity():
    try:
        if hasattr(pltpu, "get_tpu_info"):
            info = pltpu.get_tpu_info()
            for attr in ("vmem_capacity_bytes", "vmem_bytes", "vmem_size_bytes"):
                v = getattr(info, attr, None)
                if v:
                    return int(v)
    except Exception:
        pass
    return 64 * 1024 * 1024     # conservative (v7x-sized) fallback


_VMEM_CAP = _detect_vmem_capacity()
_VMEM_LIMIT = int(min(_VMEM_CAP * 3 // 4, 100 * 1024 * 1024))   # 96MiB v5e/v6e, 48MiB v7x
_TQ_CAP = 512 if _VMEM_CAP >= 100 * 1024 * 1024 else 256


# ---------------------------------------------------------------------------
# probe whether single-buffered (pipeline_mode=pl.Buffered(1)) weight blocks work
# ---------------------------------------------------------------------------
def _probe_copy_kernel(x_ref, o_ref):
    o_ref[...] = x_ref[...]


def _supports_buffered1():
    if not hasattr(pl, "Buffered"):
        return False
    try:
        x = jnp.zeros((8, 128), jnp.float32)
        out = pl.pallas_call(
            _probe_copy_kernel,
            grid=(1,),
            in_specs=[pl.BlockSpec((8, 128), lambda i: (0, 0),
                                   pipeline_mode=pl.Buffered(1))],
            out_specs=pl.BlockSpec((8, 128), lambda i: (0, 0)),
            out_shape=jax.ShapeDtypeStruct((8, 128), jnp.float32),
        )(x)
        jax.block_until_ready(out)
        return True
    except Exception:
        return False


_USE_BUF1 = _supports_buffered1()


# ---------------------------------------------------------------------------
# small helpers
# ---------------------------------------------------------------------------
def _full(shape):
    """Whole-array block (weights / biases), constant over the grid, single-buffered."""
    imap = lambda *_: (0,) * len(shape)
    if _USE_BUF1:
        return pl.BlockSpec(shape, imap, pipeline_mode=pl.Buffered(1))
    return pl.BlockSpec(shape, imap)


def _cparams(*sems):
    return _CP(dimension_semantics=tuple(sems), vmem_limit_bytes=_VMEM_LIMIT)


def _cost(flops, bytes_accessed, transcendentals=0):
    if hasattr(pl, "CostEstimate"):
        return pl.CostEstimate(flops=int(flops), transcendentals=int(transcendentals),
                               bytes_accessed=int(bytes_accessed))
    return None


def _round_up(n, m):
    return (n + m - 1) // m * m


def _time_tile(T, cap=None):
    """Largest multiple-of-16 divisor of T <= cap (T is pre-padded to a 16-multiple)."""
    cap = _TQ_CAP if cap is None else cap
    if T <= cap:
        return T
    for t in range(cap - cap % _SUBLANE, _SUBLANE - 1, -_SUBLANE):
        if T % t == 0:
            return t
    return _SUBLANE


def _ln(x, g, b, eps):
    mu = jnp.mean(x, axis=-1, keepdims=True)
    var = jnp.mean(jnp.square(x - mu), axis=-1, keepdims=True)
    return (x - mu) * jax.lax.rsqrt(var + eps) * g + b


def _recip(x):
    return pl.reciprocal(x, approx=True) if _HAS_RECIP else 1.0 / x


def _bf16(x):
    return x.astype(jnp.bfloat16)


# ---------------------------------------------------------------------------
# fused kernels
# ---------------------------------------------------------------------------
def _input_kernel(x_ref, w_ref, b_ref, g_ref, beta_ref, pe_ref, o_ref, *, eps, scale):
    x = _bf16(x_ref[0])                                                  # (tq, idim)
    h = jnp.dot(x, w_ref[...], preferred_element_type=jnp.float32) + b_ref[...]
    h = _ln(h, g_ref[...], beta_ref[...], eps)                           # f32 stats
    h = jnp.maximum(h, 0.0)                                              # ReLU
    o_ref[0] = (h * scale + pe_ref[...]).astype(o_ref.dtype)             # fused PE add


def _ffn_kernel(*refs, eps, scale, final_ln):
    if final_ln:
        (x_ref, g_ref, b_ref, w1_ref, b1_ref, w2_ref, b2_ref,
         fg_ref, fb_ref, o_ref) = refs
    else:
        x_ref, g_ref, b_ref, w1_ref, b1_ref, w2_ref, b2_ref, o_ref = refs
    x = x_ref[0].astype(jnp.float32)                                     # (tq, D)
    h = _ln(x, g_ref[...], b_ref[...], eps)
    h = jnp.dot(_bf16(h), w1_ref[...], preferred_element_type=jnp.float32) + b1_ref[...]
    h = h * jax.nn.sigmoid(h)                                            # swish
    h = jnp.dot(_bf16(h), w2_ref[...], preferred_element_type=jnp.float32) + b2_ref[...]
    y = x + scale * h                                                    # fused residual
    if final_ln:
        y = _ln(y, fg_ref[...], fb_ref[...], eps)                        # fused final LN
    o_ref[0] = y.astype(o_ref.dtype)


def _mhsa_kernel(xq_ref, xkv_ref, g_ref, b_ref, wq_ref, bq_ref, wkv_ref, bkv_ref,
                 wo_ref, bo_ref, o_ref, *, heads, eps, t_valid):
    xq = xq_ref[0].astype(jnp.float32)                                   # (tq, D)
    xkv = xkv_ref[0].astype(jnp.float32)                                 # (T,  D)
    tq, D = xq.shape
    T = xkv.shape[0]
    dh = D // heads
    g, b = g_ref[...], b_ref[...]
    hq = _ln(xq, g, b, eps)
    hkv = _ln(xkv, g, b, eps)
    # bf16 projections with f32 accumulation
    q = jnp.dot(_bf16(hq), wq_ref[...], preferred_element_type=jnp.float32) + bq_ref[...]
    kv = jnp.dot(_bf16(hkv), wkv_ref[...], preferred_element_type=jnp.float32) + bkv_ref[...]
    k, v = kv[:, :D], kv[:, D:]
    # head-batched layout (heads, rows, dh) built from proven slice + stack ops
    qh = jnp.stack([q[:, hh * dh:(hh + 1) * dh] for hh in range(heads)], axis=0)
    kh = jnp.stack([k[:, hh * dh:(hh + 1) * dh] for hh in range(heads)], axis=0)
    vh = jnp.stack([v[:, hh * dh:(hh + 1) * dh] for hh in range(heads)], axis=0)
    sc = 1.0 / math.sqrt(dh)
    s = jnp.einsum("hqd,hkd->hqk", _bf16(qh), _bf16(kh),
                   preferred_element_type=jnp.float32) * sc              # (H, tq, T)
    if t_valid < T:                                                      # mask padded keys
        kid = jax.lax.broadcasted_iota(jnp.int32, s.shape, 2)
        s = jnp.where(kid < t_valid, s, -1e30)
    s = s - jnp.max(s, axis=-1, keepdims=True)
    p = jnp.exp(s)
    p = p * _recip(jnp.sum(p, axis=-1, keepdims=True))                   # EUP recip
    o3 = jnp.einsum("hqk,hkd->hqd", _bf16(p), _bf16(vh),
                    preferred_element_type=jnp.float32)                  # (H, tq, dh)
    a = jnp.concatenate([o3[hh] for hh in range(heads)], axis=-1)        # (tq, D)
    y = xq + jnp.dot(_bf16(a), wo_ref[...],
                     preferred_element_type=jnp.float32) + bo_ref[...]
    o_ref[0] = y.astype(o_ref.dtype)


def _conv_kernel(x_ref, g_ref, b_ref, pw1w_ref, pw1b_ref, dww_ref, dwb_ref,
                 pw2w_ref, pw2b_ref, o_ref, *, ksize, eps, t_valid):
    x = x_ref[0].astype(jnp.float32)                                     # (T, D)
    T, D = x.shape
    h = _ln(x, g_ref[...], b_ref[...], eps)
    y = jnp.dot(_bf16(h), pw1w_ref[...], preferred_element_type=jnp.float32) + pw1b_ref[...]
    glu = y[:, :D] * jax.nn.sigmoid(y[:, D:])                            # GLU -> (T, D)
    if t_valid < T:                                                      # keep pads out of taps
        rid = jax.lax.broadcasted_iota(jnp.int32, glu.shape, 0)
        glu = jnp.where(rid < t_valid, glu, 0.0)
    pad = (ksize - 1) // 2
    zpad = jnp.zeros((pad, D), jnp.float32)
    gp = jnp.concatenate([zpad, glu, zpad], axis=0)                      # in-VMEM halo pad
    w_all = dww_ref[...]                                                 # (K, D) BN pre-folded
    acc = jnp.zeros((T, D), jnp.float32) + dwb_ref[...]
    for kk in range(ksize):                                              # static tap unroll
        acc = acc + gp[kk:kk + T, :] * w_all[kk:kk + 1, :]
    a = acc * jax.nn.sigmoid(acc)                                        # swish (BN folded)
    y2 = x + jnp.dot(_bf16(a), pw2w_ref[...],
                     preferred_element_type=jnp.float32) + pw2b_ref[...]
    o_ref[0] = y2.astype(o_ref.dtype)


# ---------------------------------------------------------------------------
# pallas_call wrappers (one per fused sub-layer)
# ---------------------------------------------------------------------------
def input_layer(x_u, w, b, ln_g, ln_b, pe_rows, scale, eps=_LN_EPS):
    B, T, idim = x_u.shape
    adim = w.shape[1]
    tq = _time_tile(T)
    nt = T // tq
    return pl.pallas_call(
        partial(_input_kernel, eps=eps, scale=scale),
        grid=(B, nt),
        in_specs=[pl.BlockSpec((1, tq, idim), lambda bi, ti: (bi, ti, 0)),
                  _full((idim, adim)), _full((1, adim)),
                  _full((1, adim)), _full((1, adim)),
                  pl.BlockSpec((tq, adim), lambda bi, ti: (ti, 0))],
        out_specs=pl.BlockSpec((1, tq, adim), lambda bi, ti: (bi, ti, 0)),
        out_shape=jax.ShapeDtypeStruct((B, T, adim), _ACT_DTYPE),
        compiler_params=_cparams("parallel", "parallel"),
        cost_estimate=_cost(2 * B * T * idim * adim,
                            4 * B * T * idim + 2 * (B * T * adim + idim * adim)),
    )(x_u, _bf16(w), b.reshape(1, adim), ln_g.reshape(1, adim), ln_b.reshape(1, adim),
      pe_rows)


def ffn_sublayer(x_btd, ln_g, ln_b, w1, b1, w2, b2, *, scale=0.5,
                 fin_g=None, fin_b=None, out_dtype=None, eps=_LN_EPS):
    B, T, D = x_btd.shape
    E = w1.shape[1]
    tq = _time_tile(T)
    nt = T // tq
    final_ln = fin_g is not None
    out_dtype = x_btd.dtype if out_dtype is None else out_dtype
    args = [x_btd, ln_g.reshape(1, D), ln_b.reshape(1, D),
            _bf16(w1), b1.reshape(1, E), _bf16(w2), b2.reshape(1, D)]
    in_specs = [pl.BlockSpec((1, tq, D), lambda bi, ti: (bi, ti, 0)),
                _full((1, D)), _full((1, D)),
                _full((D, E)), _full((1, E)),
                _full((E, D)), _full((1, D))]
    if final_ln:
        args += [fin_g.reshape(1, D), fin_b.reshape(1, D)]
        in_specs += [_full((1, D)), _full((1, D))]
    aliases = {0: 0} if jnp.dtype(out_dtype) == x_btd.dtype else {}
    return pl.pallas_call(
        partial(_ffn_kernel, eps=eps, scale=scale, final_ln=final_ln),
        grid=(B, nt),
        in_specs=in_specs,
        out_specs=pl.BlockSpec((1, tq, D), lambda bi, ti: (bi, ti, 0)),
        out_shape=jax.ShapeDtypeStruct((B, T, D), out_dtype),
        compiler_params=_cparams("parallel", "parallel"),
        input_output_aliases=aliases,
        cost_estimate=_cost(4 * B * T * D * E, 2 * (2 * B * T * D + 2 * D * E),
                            transcendentals=B * T * E),
    )(*args)


def mhsa_sublayer(x_btd, ln_g, ln_b, wq, bq, wkv, bkv, wo, bo, heads, t_valid,
                  eps=_LN_EPS):
    B, T, D = x_btd.shape
    tq = _time_tile(T)
    nt = T // tq
    return pl.pallas_call(
        partial(_mhsa_kernel, heads=heads, eps=eps, t_valid=t_valid),
        grid=(B, nt),
        in_specs=[pl.BlockSpec((1, tq, D), lambda bi, qi: (bi, qi, 0)),   # query tile
                  pl.BlockSpec((1, T, D), lambda bi, qi: (bi, 0, 0)),     # full KV rows
                  _full((1, D)), _full((1, D)),
                  _full((D, D)), _full((1, D)),
                  _full((D, 2 * D)), _full((1, 2 * D)),
                  _full((D, D)), _full((1, D))],
        out_specs=pl.BlockSpec((1, tq, D), lambda bi, qi: (bi, qi, 0)),
        out_shape=jax.ShapeDtypeStruct((B, T, D), x_btd.dtype),
        compiler_params=_cparams("parallel", "parallel"),
        cost_estimate=_cost(2 * B * T * D * 4 * D + 4 * B * T * T * D,
                            2 * (2 * B * T * D + 4 * D * D),
                            transcendentals=B * heads * T * T),
    )(x_btd, x_btd, ln_g.reshape(1, D), ln_b.reshape(1, D),
      _bf16(wq), bq.reshape(1, D), _bf16(wkv), bkv.reshape(1, 2 * D),
      _bf16(wo), bo.reshape(1, D))


def conv_sublayer(x_btd, ln_g, ln_b, pw1_w, pw1_b, dw_w, dw_b, pw2_w, pw2_b,
                  t_valid, eps=_LN_EPS):
    B, T, D = x_btd.shape
    K = dw_w.shape[0]
    return pl.pallas_call(
        partial(_conv_kernel, ksize=K, eps=eps, t_valid=t_valid),
        grid=(B,),
        in_specs=[pl.BlockSpec((1, T, D), lambda b: (b, 0, 0)),
                  _full((1, D)), _full((1, D)),
                  _full((D, 2 * D)), _full((1, 2 * D)),
                  _full((K, D)), _full((1, D)),
                  _full((D, D)), _full((1, D))],
        out_specs=pl.BlockSpec((1, T, D), lambda b: (b, 0, 0)),
        out_shape=jax.ShapeDtypeStruct((B, T, D), x_btd.dtype),
        compiler_params=_cparams("parallel"),
        input_output_aliases={0: 0},
        cost_estimate=_cost(2 * B * T * D * 3 * D + 2 * B * T * D * K,
                            2 * (2 * B * T * D + 3 * D * D) + 4 * K * D,
                            transcendentals=3 * B * T * D),
    )(x_btd, ln_g.reshape(1, D), ln_b.reshape(1, D),
      _bf16(pw1_w), pw1_b.reshape(1, 2 * D), dw_w, dw_b.reshape(1, D),
      _bf16(pw2_w), pw2_b.reshape(1, D))


# ---------------------------------------------------------------------------
# model glue
# ---------------------------------------------------------------------------
def _prepare_block(p):
    """Concat K/V weights and fold inference BatchNorm into the depthwise conv."""
    wkv = jnp.concatenate([p["wk"], p["wv"]], axis=1)                    # (D, 2D)
    bkv = jnp.concatenate([p["bk"], p["bv"]], axis=0)                    # (2D,)
    bn_scale = p["bn_g"] * jax.lax.rsqrt(p["bn_v"] + _BN_EPS)
    dw_w = p["dw_w"] * bn_scale[None, :]
    dw_b = p["dw_b"] * bn_scale + (p["bn_b"] - p["bn_m"] * bn_scale)
    return p["wq"], p["bq"], wkv, bkv, dw_w, dw_b


def conformer_block(x_btd, p, aheads, t_valid, out_dtype):
    wq, bq, wkv, bkv, dw_w, dw_b = _prepare_block(p)
    # macaron feed-forward (x + 0.5 * FFN(LN(x)))
    x = ffn_sublayer(x_btd, p["ff1_ln_g"], p["ff1_ln_b"],
                     p["ff1_w1"], p["ff1_b1"], p["ff1_w2"], p["ff1_b2"], scale=0.5)
    # multi-head self-attention (x + Wo(attn(LN(x))))
    x = mhsa_sublayer(x, p["att_ln_g"], p["att_ln_b"], wq, bq, wkv, bkv,
                      p["wo"], p["bo"], aheads, t_valid)
    # convolution module (x + conv(LN(x)))
    x = conv_sublayer(x, p["conv_ln_g"], p["conv_ln_b"],
                      p["pw1_w"], p["pw1_b"], dw_w, dw_b, p["pw2_w"], p["pw2_b"],
                      t_valid)
    # second feed-forward + final layernorm, all fused
    x = ffn_sublayer(x, p["ff2_ln_g"], p["ff2_ln_b"],
                     p["ff2_w1"], p["ff2_b1"], p["ff2_w2"], p["ff2_b2"], scale=0.5,
                     fin_g=p["fin_ln_g"], fin_b=p["fin_ln_b"], out_dtype=out_dtype)
    return x


def conformer_masked_encoder(params, x, inds, cls_token=True, unmasked_only=False):
    masked_id, unmasked_id = inds[0], inds[1]
    if cls_token:
        inds_all = jnp.concatenate(
            [jnp.zeros((1,), jnp.int32), masked_id + 1, unmasked_id + 1])
    else:
        inds_all = jnp.concatenate([masked_id, unmasked_id])

    B, fn, d = x.shape
    if not unmasked_only:
        x_u = x
        inds_all = jnp.sort(inds_all)
    else:
        # TODO(synk): mirrors the reference's shape assumption (x time dim ==
        # len(unmasked_)+?); quirk inherited from the PyTorch spec.
        unmasked_ = jnp.concatenate([jnp.zeros((1,), jnp.int32), unmasked_id + 1])
        x_u = jnp.zeros((B, inds_all.shape[0], d), x.dtype)
        x_u = x_u.at[:, unmasked_, :].set(x)
        order = jnp.sort(unmasked_)
        x_u = x_u[:, order, :]
        inds_all = order

    adim = params["in_w"].shape[1]
    # positional-encoding row gather is cheap host-side glue
    pe_rows = jnp.take(params["pe"], inds_all, axis=0)                   # (T0, adim)

    # pad time to a sublane-friendly multiple; padded rows are masked out of
    # attention keys and zeroed before the depthwise conv taps.
    T0 = x_u.shape[1]
    T = _round_up(T0, _SUBLANE)
    if T != T0:
        x_u = jnp.pad(x_u, ((0, 0), (0, T - T0), (0, 0)))
        pe_rows = jnp.pad(pe_rows, ((0, T - T0), (0, 0)))

    # fused: Linear -> LayerNorm -> ReLU -> *sqrt(adim) + PE   (bf16 residual stream)
    h = input_layer(x_u, params["in_w"], params["in_b"],
                    params["in_ln_g"], params["in_ln_b"], pe_rows,
                    scale=math.sqrt(adim))
    nblk = len(params["blocks"])
    for li, blk in enumerate(params["blocks"]):
        out_dtype = jnp.float32 if li == nblk - 1 else _ACT_DTYPE
        h = conformer_block(h, blk, params["aheads"], t_valid=T0, out_dtype=out_dtype)
    if h.dtype != jnp.float32:
        h = h.astype(jnp.float32)
    if T != T0:
        h = h[:, :T0, :]
    return h, inds


# ---------------------------------------------------------------------------
# deterministic parameter initialization
# ---------------------------------------------------------------------------
def _linear_init(key, fan_in, fan_out):
    k1, k2 = jax.random.split(key)
    bound = 1.0 / math.sqrt(fan_in)
    w = jax.random.uniform(k1, (fan_in, fan_out), jnp.float32, -bound, bound)
    b = jax.random.uniform(k2, (fan_out,), jnp.float32, -bound, bound)
    return w, b


def _make_pe(max_len, d):
    pos = jnp.arange(max_len, dtype=jnp.float32)[:, None]
    div = jnp.exp(jnp.arange(0, d, 2, dtype=jnp.float32) * (-math.log(10000.0) / d))
    pe = jnp.zeros((max_len, d), jnp.float32)
    pe = pe.at[:, 0::2].set(jnp.sin(pos * div))
    pe = pe.at[:, 1::2].set(jnp.cos(pos * div))
    return pe


def init_params(key, idim, adim, eunits, aheads, elayers, ksize, max_len=512):
    keys = jax.random.split(key, 1 + elayers)
    in_w, in_b = _linear_init(keys[0], idim, adim)
    ones, zeros = jnp.ones((adim,), jnp.float32), jnp.zeros((adim,), jnp.float32)
    params = dict(
        aheads=aheads,
        in_w=in_w, in_b=in_b, in_ln_g=ones, in_ln_b=zeros,
        pe=_make_pe(max_len, adim),
        blocks=[],
    )
    for layer in range(elayers):
        ks = jax.random.split(keys[1 + layer], 12)
        ff1_w1, ff1_b1 = _linear_init(ks[0], adim, eunits)
        ff1_w2, ff1_b2 = _linear_init(ks[1], eunits, adim)
        wq, bq = _linear_init(ks[2], adim, adim)
        wk, bk = _linear_init(ks[3], adim, adim)
        wv, bv = _linear_init(ks[4], adim, adim)
        wo, bo = _linear_init(ks[5], adim, adim)
        pw1_w, pw1_b = _linear_init(ks[6], adim, 2 * adim)
        dwb = 1.0 / math.sqrt(ksize)
        dw_w = jax.random.uniform(ks[7], (ksize, adim), jnp.float32, -dwb, dwb)
        dw_b = jax.random.uniform(ks[8], (adim,), jnp.float32, -dwb, dwb)
        pw2_w, pw2_b = _linear_init(ks[9], adim, adim)
        ff2_w1, ff2_b1 = _linear_init(ks[10], adim, eunits)
        ff2_w2, ff2_b2 = _linear_init(ks[11], eunits, adim)
        params["blocks"].append(dict(
            ff1_ln_g=ones, ff1_ln_b=zeros,
            ff1_w1=ff1_w1, ff1_b1=ff1_b1, ff1_w2=ff1_w2, ff1_b2=ff1_b2,
            att_ln_g=ones, att_ln_b=zeros,
            wq=wq, bq=bq, wk=wk, bk=bk, wv=wv, bv=bv, wo=wo, bo=bo,
            conv_ln_g=ones, conv_ln_b=zeros,
            pw1_w=pw1_w, pw1_b=pw1_b, dw_w=dw_w, dw_b=dw_b,
            bn_g=ones, bn_b=zeros, bn_m=zeros, bn_v=jnp.ones((adim,), jnp.float32),
            pw2_w=pw2_w, pw2_b=pw2_b,
            ff2_ln_g=ones, ff2_ln_b=zeros,
            ff2_w1=ff2_w1, ff2_b1=ff2_b1, ff2_w2=ff2_w2, ff2_b2=ff2_b2,
            fin_ln_g=ones, fin_ln_b=zeros,
        ))
    return params


# ---------------------------------------------------------------------------
if __name__ == "__main__":
    key = jax.random.PRNGKey(0)
    idim, adim, eunits, aheads, elayers, ksize = 16, 32, 64, 4, 2, 7
    B = 2

    masked_id = jnp.array([1, 3, 5], jnp.int32)
    unmasked_id = jnp.array([0, 2, 4, 6], jnp.int32)
    fn = 1 + masked_id.shape[0] + unmasked_id.shape[0]   # cls token + all frames

    kp, kx = jax.random.split(key)
    params = init_params(kp, idim, adim, eunits, aheads, elayers, ksize)
    x = jax.random.normal(kx, (B, fn, idim), jnp.float32)

    out, _ = conformer_masked_encoder(params, x, (masked_id, unmasked_id),
                                      cls_token=True, unmasked_only=False)
    jax.block_until_ready(out)
    assert out.shape == (B, fn, adim) and out.dtype == jnp.float32
    assert bool(jnp.all(jnp.isfinite(out)))
    print("KERNEL_OK")
</pallas_src>

<mosaic_0001>
module attributes {stable_mosaic.version = 11 : i64} {
  func.func @_probe_copy_kernel(%arg0: i32, %arg1: memref<8x128xf32, #tpu.memory_space<vmem>>, %arg2: memref<8x128xf32, #tpu.memory_space<vmem>>) attributes {dimension_semantics = [#tpu.dimension_semantics<arbitrary>], iteration_bounds = array<i64: 1>, scalar_prefetch = 0 : i64, scratch_operands = 0 : i64, tpu.core_type = #tpu.core_type<tc>, window_params = [{pipeline_mode = #tpu.pipeline_mode<synchronous>, transform_indices = @transform_0, window_bounds = array<i64: 8, 128>}, {pipeline_mode = #tpu.pipeline_mode<synchronous>, transform_indices = @transform_1, window_bounds = array<i64: 8, 128>}]} {
    %c0 = arith.constant 0 : index
    %c0_0 = arith.constant 0 : index
    %0 = vector.load %arg1[%c0, %c0_0] : memref<8x128xf32, #tpu.memory_space<vmem>>, vector<8x128xf32>
    %c0_1 = arith.constant 0 : index
    %c0_2 = arith.constant 0 : index
    %1 = vector.load %arg2[%c0_1, %c0_2] : memref<8x128xf32, #tpu.memory_space<vmem>>, vector<8x128xf32>
    tpu.vector_store %arg2[%c0_1, %c0_2], %0 {strides = array<i32>} : memref<8x128xf32, #tpu.memory_space<vmem>>, vector<8x128xf32>,
    return
  }
  func.func @transform_0(%arg0: i32) -> (i32, i32) {
    %c0_i32 = arith.constant 0 : i32
    %c0_i32_0 = arith.constant 0 : i32
    %c0_i32_1 = arith.constant 0 : i32
    return %c0_i32, %c0_i32_0 : i32, i32
  }
  func.func @transform_1(%arg0: i32) -> (i32, i32) {
    %c0_i32 = arith.constant 0 : i32
    %c0_i32_0 = arith.constant 0 : i32
    %c0_i32_1 = arith.constant 0 : i32
    return %c0_i32, %c0_i32_0 : i32, i32
  }
}

module attributes {stable_mosaic.version = 11 : i64} {
  func.func @_input_kernel(%arg0: i32, %arg1: i32, %arg2: memref<1x16x16xf32, #tpu.memory_space<vmem>>, %arg3: memref<16x32xbf16, #tpu.memory_space<vmem>>, %arg4: memref<1x32xf32, #tpu.memory_space<vmem>>, %arg5: memref<1x32xf32, #tpu.memory_space<vmem>>, %arg6: memref<1x32xf32, #tpu.memory_space<vmem>>, %arg7: memref<16x32xf32, #tpu.memory_space<vmem>>, %arg8: memref<1x16x32xbf16, #tpu.memory_space<vmem>>) attributes {dimension_semantics = [#tpu.dimension_semantics<parallel>, #tpu.dimension_semantics<parallel>], iteration_bounds = array<i64: 2, 1>, scalar_prefetch = 0 : i64, scratch_operands = 0 : i64, tpu.core_type = #tpu.core_type<tc>, window_params = [{transform_indices = @transform_0, window_bounds = array<i64: 1, 16, 16>}, {pipeline_mode = #tpu.pipeline_mode<synchronous>, transform_indices = @transform_1, window_bounds = array<i64: 16, 32>}, {pipeline_mode = #tpu.pipeline_mode<synchronous>, transform_indices = @transform_2, window_bounds = array<i64: 1, 32>}, {pipeline_mode = #tpu.pipeline_mode<synchronous>, transform_indices = @transform_3, window_bounds = array<i64: 1, 32>}, {pipeline_mode = #tpu.pipeline_mode<synchronous>, transform_indices = @transform_4, window_bounds = array<i64: 1, 32>}, {transform_indices = @transform_5, window_bounds = array<i64: 16, 32>}, {transform_indices = @transform_6, window_bounds = array<i64: 1, 16, 32>}]} {
    %c0 = arith.constant 0 : index
    %c0_0 = arith.constant 0 : index
    %c0_1 = arith.constant 0 : index
    %0 = vector.load %arg2[%c0, %c0_0, %c0_1] : memref<1x16x16xf32, #tpu.memory_space<vmem>>, vector<1x16x16xf32>
    %1 = vector.shape_cast %0 : vector<1x16x16xf32> to vector<16x16xf32>
    %2 = arith.truncf %1 : vector<16x16xf32> to vector<16x16xbf16>
    %c0_2 = arith.constant 0 : index
    %c0_3 = arith.constant 0 : index
    %3 = vector.load %arg3[%c0_2, %c0_3] : memref<16x32xbf16, #tpu.memory_space<vmem>>, vector<16x32xbf16>
    %cst = arith.constant dense<0.000000e+00> : vector<16x32xf32>
    %4 = tpu.matmul %2, %3, %cst {dimension_numbers = #tpu.dot_dimension_numbers<[1], [0], [0], [1], [0, 0, 1, 1], [], []>} : vector<16x16xbf16>, vector<16x32xbf16>, vector<16x32xf32> -> vector<16x32xf32>
    %c0_4 = arith.constant 0 : index
    %c0_5 = arith.constant 0 : index
    %5 = vector.load %arg4[%c0_4, %c0_5] : memref<1x32xf32, #tpu.memory_space<vmem>>, vector<1x32xf32>
    %6 = vector.broadcast %5 : vector<1x32xf32> to vector<16x32xf32>
    %7 = arith.addf %4, %6 : vector<16x32xf32>
    %c0_6 = arith.constant 0 : index
    %c0_7 = arith.constant 0 : index
    %8 = vector.load %arg5[%c0_6, %c0_7] : memref<1x32xf32, #tpu.memory_space<vmem>>, vector<1x32xf32>
    %c0_8 = arith.constant 0 : index
    %c0_9 = arith.constant 0 : index
    %9 = vector.load %arg6[%c0_8, %c0_9] : memref<1x32xf32, #tpu.memory_space<vmem>>, vector<1x32xf32>
    %cst_10 = arith.constant dense<0.000000e+00> : vector<16xf32>
    %10 = vector.multi_reduction <add>, %7, %cst_10 [1] : vector<16x32xf32> to vector<16xf32>
    %11 = vector.shape_cast %10 : vector<16xf32> to vector<16x1xf32>
    %cst_11 = arith.constant 3.200000e+01 : f32
    %12 = vector.broadcast %cst_11 : f32 to vector<16x1xf32>
    %13 = arith.divf %11, %12 : vector<16x1xf32>
    %14 = vector.broadcast %13 : vector<16x1xf32> to vector<16x32xf32>
    %15 = arith.subf %7, %14 : vector<16x32xf32>
    %16 = arith.mulf %15, %15 : vector<16x32xf32>
    %cst_12 = arith.constant dense<0.000000e+00> : vector<16xf32>
    %17 = vector.multi_reduction <add>, %16, %cst_12 [1] : vector<16x32xf32> to vector<16xf32>
    %18 = vector.shape_cast %17 : vector<16xf32> to vector<16x1xf32>
    %cst_13 = arith.constant 3.200000e+01 : f32
    %19 = vector.broadcast %cst_13 : f32 to vector<16x1xf32>
    %20 = arith.divf %18, %19 : vector<16x1xf32>
    %21 = vector.broadcast %13 : vector<16x1xf32> to vector<16x32xf32>
    %22 = arith.subf %7, %21 : vector<16x32xf32>
    %cst_14 = arith.constant 9.99999974E-6 : f32
    %23 = vector.broadcast %cst_14 : f32 to vector<16x1xf32>
    %24 = arith.addf %20, %23 : vector<16x1xf32>
    %25 = math.rsqrt %24 : vector<16x1xf32>
    %26 = vector.broadcast %25 : vector<16x1xf32> to vector<16x32xf32>
    %27 = arith.mulf %22, %26 : vector<16x32xf32>
    %28 = vector.broadcast %8 : vector<1x32xf32> to vector<16x32xf32>
    %29 = arith.mulf %27, %28 : vector<16x32xf32>
    %30 = vector.broadcast %9 : vector<1x32xf32> to vector<16x32xf32>
    %31 = arith.addf %29, %30 : vector<16x32xf32>
    %cst_15 = arith.constant 0.000000e+00 : f32
    %32 = vector.broadcast %cst_15 : f32 to vector<16x32xf32>
    %33 = arith.maximumf %31, %32 : vector<16x32xf32>
    %cst_16 = arith.constant 5.65685415 : f32
    %34 = vector.broadcast %cst_16 : f32 to vector<16x32xf32>
    %35 = arith.mulf %33, %34 : vector<16x32xf32>
    %c0_17 = arith.constant 0 : index
    %c0_18 = arith.constant 0 : index
    %36 = vector.load %arg7[%c0_17, %c0_18] : memref<16x32xf32, #tpu.memory_space<vmem>>, vector<16x32xf32>
    %37 = arith.addf %35, %36 : vector<16x32xf32>
    %38 = arith.truncf %37 : vector<16x32xf32> to vector<16x32xbf16>
    %c0_19 = arith.constant 0 : index
    %c0_20 = arith.constant 0 : index
    %c0_21 = arith.constant 0 : index
    %39 = vector.load %arg8[%c0_19, %c0_20, %c0_21] : memref<1x16x32xbf16, #tpu.memory_space<vmem>>, vector<1x16x32xbf16>
    %40 = vector.shape_cast %39 : vector<1x16x32xbf16> to vector<16x32xbf16>
    %41 = vector.shape_cast %38 : vector<16x32xbf16> to vector<1x16x32xbf16>
    tpu.vector_store %arg8[%c0_19, %c0_20, %c0_21], %41 {strides = array<i32>} : memref<1x16x32xbf16, #tpu.memory_space<vmem>>, vector<1x16x32xbf16>,
    return
  }
  func.func @transform_0(%arg0: i32, %arg1: i32) -> (i32, i32, i32) {
    %c0_i32 = arith.constant 0 : i32
    %c0_i32_0 = arith.constant 0 : i32
    return %arg0, %arg1, %c0_i32 : i32, i32, i32
  }
  func.func @transform_1(%arg0: i32, %arg1: i32) -> (i32, i32) {
    %c0_i32 = arith.constant 0 : i32
    %c0_i32_0 = arith.constant 0 : i32
    %c0_i32_1 = arith.constant 0 : i32
    return %c0_i32, %c0_i32_0 : i32, i32
  }
  func.func @transform_2(%arg0: i32, %arg1: i32) -> (i32, i32) {
    %c0_i32 = arith.constant 0 : i32
    %c0_i32_0 = arith.constant 0 : i32
    %c0_i32_1 = arith.constant 0 : i32
    return %c0_i32, %c0_i32_0 : i32, i32
  }
  func.func @transform_3(%arg0: i32, %arg1: i32) -> (i32, i32) {
    %c0_i32 = arith.constant 0 : i32
    %c0_i32_0 = arith.constant 0 : i32
    %c0_i32_1 = arith.constant 0 : i32
    return %c0_i32, %c0_i32_0 : i32, i32
  }
  func.func @transform_4(%arg0: i32, %arg1: i32) -> (i32, i32) {
    %c0_i32 = arith.constant 0 : i32
    %c0_i32_0 = arith.constant 0 : i32
    %c0_i32_1 = arith.constant 0 : i32
    return %c0_i32, %c0_i32_0 : i32, i32
  }
  func.func @transform_5(%arg0: i32, %arg1: i32) -> (i32, i32) {
    %c0_i32 = arith.constant 0 : i32
    %c0_i32_0 = arith.constant 0 : i32
    return %arg1, %c0_i32 : i32, i32
  }
  func.func @transform_6(%arg0: i32, %arg1: i32) -> (i32, i32, i32) {
    %c0_i32 = arith.constant 0 : i32
    %c0_i32_0 = arith.constant 0 : i32
    return %arg0, %arg1, %c0_i32 : i32, i32, i32
  }
}

</mosaic_0001>

<llo_original>
// kernel: tpu_custom_call.1
$region0: #{tpu_custom_call.1}
  #allocation0 [shape = 'u32[]', space=smem, size = 0x4, offset = 0x4, fixed_abs, tag = 'smem constant byte address 0x4 - core index']
  #allocation1 [shape = 'u32[144,128]{1,0:T(1,128)}', space=vmem, size = 0x12000, scoped, tag = 'internal scratch']
  %s0 = inlined_call_operand.hbm [shape: f32[8,128], index: 0, kind: input, shape index: {}]
  %s1 = inlined_call_operand.hbm [shape: f32[8,128], index: 1, kind: output, shape index: {}]
  %s2 = sld [smem:[#allocation0]]
  $region18: #{tpu_custom_call.1} parent=0
    _
  %s4 = ssub.s32 1, %s2
  %s5 = scalar_select 0, %s4, %s2
  $region1: #{tpu_custom_call.1} parent=0
    #allocation2 [shape = 'u8[4096]{0}', space=vmem, size = 0x1000, scoped, tag = 'input window, operand 0, single buffered']
    #allocation3 [shape = 's32[1]{0}', space=sflag, size = 0x4, scoped, tag = 'scoped memory for tpu_custom_call.1']
    #allocation4 [shape = 's32[1]{0}', space=sflag, size = 0x4, scoped, tag = 'scoped memory for tpu_custom_call.1']
    #allocation5 [shape = 'u8[4096]{0}', space=vmem, size = 0x1000, scoped, tag = 'output window, operand 0, single buffered']
    %6 = vsyncpa [#allocation3], 0
    %7 = vsyncpa [#allocation4], 0
    // Predicated region
    $region2: #{tpu_custom_call.1} parent=1 // pred_check
      _
    $region3: #{tpu_custom_call.1} parent=1 // pred_check_branch
      %9 = sbr.rel (0) target = $region5
    $region4: #{tpu_custom_call.1} parent=1 // pred_region
      %s11 = ssub.s32 128, 128
      %12 = vsyncadd [#allocation3], %s11
      %s14 = sshll.u32 [#allocation2], 4
      %s15 = int_to_ptr.vmem [resolvable:$true] %s14
      %17 = dma.hbm_to_vmem [thread:$0]  %s0, 128, %s15, [#allocation3]
    $region5: #{tpu_custom_call.1} parent=1 // pred_fallthru
      _
    // Predicated region
    $region6: #{tpu_custom_call.1} parent=1 // pred_check
      _
    $region7: #{tpu_custom_call.1} parent=1 // pred_check_branch
      %19 = sbr.rel (0) target = $region9
    $region8: #{tpu_custom_call.1} parent=1 // pred_region
      %20 = dma.done [#allocation3], 128
    $region9: #{tpu_custom_call.1} parent=1 // pred_fallthru
      _
    %v21 = vld [vmem:[#allocation2] sm:$0xff]
    %22 = vst [vmem:[#allocation5] sm:$0xff] %v21
    // Predicated region
    $region10: #{tpu_custom_call.1} parent=1 // pred_check
      _
    $region11: #{tpu_custom_call.1} parent=1 // pred_check_branch
      %24 = sbr.rel (0) target = $region13
    $region12: #{tpu_custom_call.1} parent=1 // pred_region
      %s26 = ssub.s32 128, 128
      %27 = vsyncadd [#allocation4], %s26
      %s29 = sshll.u32 [#allocation5], 4
      %s30 = int_to_ptr.vmem [resolvable:$true] %s29
      %32 = dma.vmem_to_hbm [thread:$0]  %s30, 128, %s1, [#allocation4]
    $region13: #{tpu_custom_call.1} parent=1 // pred_fallthru
      _
    // Predicated region
    $region14: #{tpu_custom_call.1} parent=1 // pred_check
      _
    $region15: #{tpu_custom_call.1} parent=1 // pred_check_branch
      %34 = sbr.rel (0) target = $region17
    $region16: #{tpu_custom_call.1} parent=1 // pred_region
      %35 = dma.done [#allocation4], 128
    $region17: #{tpu_custom_call.1} parent=1 // pred_fallthru
      _
    %36 = vsyncpa [#allocation3], 1
    %37 = vsyncpa [#allocation4], 1

// kernel: tpu_custom_call.1
$region0: #{tpu_custom_call.1}
  #allocation0 [shape = 'u32[]', space=smem, size = 0x4, offset = 0x4, fixed_abs, tag = 'smem constant byte address 0x4 - core index']
  #allocation1 [shape = 'u32[144,128]{1,0:T(1,128)}', space=vmem, size = 0x12000, scoped, tag = 'internal scratch']
  %s0 = inlined_call_operand.hbm [shape: f32[2,16,16], index: 0, kind: input, shape index: {}]
  %s1 = inlined_call_operand.hbm [shape: bf16[16,32], index: 1, kind: input, shape index: {}]
  %s2 = inlined_call_operand.vmem [shape: f32[1,32], index: 2, kind: input, shape index: {}]
  %s3 = inlined_call_operand.vmem [shape: f32[1,32], index: 3, kind: input, shape index: {}]
  %s4 = inlined_call_operand.vmem [shape: f32[1,32], index: 4, kind: input, shape index: {}]
  %s5 = inlined_call_operand.hbm [shape: f32[16,32], index: 5, kind: input, shape index: {}]
  %s6 = inlined_call_operand.hbm [shape: bf16[2,16,32], index: 6, kind: output, shape index: {}]
  %s7 = sld [smem:[#allocation0]]
  $region69: #{tpu_custom_call.1} parent=0
    _
  %s9 = ssub.s32 1, %s7
  %s10 = scalar_select 0, %s9, %s7
  $region1: #{tpu_custom_call.1} parent=0
    #allocation2 [shape = 'u8[16384]{0}', space=vmem, size = 0x4000, scoped, tag = 'input window, operand 0']
    #allocation3 [shape = 's32[2]{0}', space=sflag, size = 0x8, scoped, tag = 'scoped memory for tpu_custom_call.1']
    #allocation4 [shape = 's32[2]{0}', space=sflag, size = 0x8, scoped, tag = 'scoped memory for tpu_custom_call.1']
    #allocation5 [shape = 'u8[4096]{0}', space=vmem, size = 0x1000, scoped, tag = 'input window, operand 1, single buffered']
    #allocation6 [shape = 's32[1]{0}', space=sflag, size = 0x4, scoped, tag = 'scoped memory for tpu_custom_call.1']
    #allocation7 [shape = 'u8[8192]{0}', space=vmem, size = 0x2000, scoped, tag = 'input window, operand 5, single buffered']
    #allocation8 [shape = 'u8[8192]{0}', space=vmem, size = 0x2000, scoped, tag = 'output window, operand 0']
    %11 = vsyncpa [#allocation3], 0
    %s12 = scalar_lea.sflag [#allocation3], 1
    %13 = vsyncpa %s12, 0
    %14 = vsyncpa [#allocation6], 0
    %15 = vsyncpa [#allocation4], 0
    %s16 = scalar_lea.sflag [#allocation4], 1
    %17 = vsyncpa %s16, 0
    loop: start=0, step=1, limit=4
    $region2: #{tpu_custom_call.1} parent=1 // loop_pre_header
      _
    $region3: #{tpu_custom_call.1} parent=1 // loop_header
      %s19 = sphi 0, %s23
      %p20 = scmp.ge.s32.totalorder %s19, 4
      %s26 = sphi 0, %s38
      %s27 = sphi 0, %s34
      %s28 = sphi 0, %s26
      %s29 = sphi 0, %s27
      %s30 = sphi 0, %s28
      %s31 = sphi 0, %s29
      %s43 = sphi 0, %s45
      %s46 = sphi 0, %s43
      %s47 = sphi 0, %s46
      %s63 = sphi 0, %s47
      %s67 = sphi 0, %s67
      %s69 = sphi 0, %s67
      %s70 = sphi 0, %s69
      %s84 = sphi 0, %s70
      %s88 = sphi 0, %s88
      %s90 = sphi 0, %s88
      %s91 = sphi 0, %s90
      %s105 = sphi 0, %s91
      %s109 = sphi 0, %s109
      %s111 = sphi 0, %s109
      %s112 = sphi 0, %s111
      %s126 = sphi 0, %s112
      %s130 = sphi 0, %s130
      %s132 = sphi 0, %s130
      %s133 = sphi 0, %s132
      %s147 = sphi 0, %s133
      %s153 = sphi 0, %s155
      %s156 = sphi 0, %s153
      %s157 = sphi 0, %s156
      %s173 = sphi 0, %s157
      %s181 = sphi 0, %s183
      %s184 = sphi 0, %s181
      %s185 = sphi 0, %s184
      %s201 = sphi 0, %s185
    $region4: #{tpu_custom_call.1} parent=1 // loop_header_branch
      %22 = sbr.rel (%p20) target = $region8
    $region5: #{tpu_custom_call.1} parent=1 // loop_body
      %s24 = ssub.s32 %s19, 1
      %s25 = ssub.s32 %s19, 2
      %s32 = sadd.s32 1, %s27
      %p33 = scmp.ge.s32.totalorder %s32, 1
      %s34 = scalar_select %p33, 0, %s32
      %s35 = sadd.s32 1, %s26
      %s36 = scalar_select %p33, %s35, %s26
      %p37 = scmp.ge.s32.totalorder %s36, 2
      %s38 = scalar_select %p37, 0, %s36
      %s39 = ssub.s32 %s26, %s38
      %s40 = ssub.s32 %s27, %s34
      %s41 = sor.u32 %s39, %s40
      %p42 = scmp.eq.s32.totalorder %s41, 0
      %s44 = sadd.s32 %s43, 1
      %s45 = scalar_select %p42, %s43, %s44
      %p48 = pneg %p42
      %p49 = scmp.eq.s32.totalorder %s19, 1
      %p50 = por %p48, %p49
      %p51 = scmp.ne.s32.totalorder %s43, %s46
      %p52 = scmp.eq.s32.totalorder %s19, 0
      %p53 = por %p51, %p52
      %p54 = scmp.ne.s32.totalorder %s43, %s46
      %p55 = scmp.eq.s32.totalorder %s24, 1
      %p56 = por %p54, %p55
      %p57 = scmp.ne.s32.totalorder %s46, %s47
      %p58 = scmp.eq.s32.totalorder %s24, 0
      %p59 = por %p57, %p58
      %p60 = scmp.ne.s32.totalorder %s46, %s47
      %p61 = scmp.eq.s32.totalorder %s25, 1
      %p62 = por %p60, %p61
      %p64 = scmp.ne.s32.totalorder %s47, %s63
      %p65 = scmp.eq.s32.totalorder %s25, 0
      %p66 = por %p64, %p65
      %s68 = sadd.s32 %s67, 1
      %p71 = scmp.eq.s32.totalorder %s19, 1
      %p72 = scmp.ne.s32.totalorder %s67, %s69
      %p73 = scmp.eq.s32.totalorder %s19, 0
      %p74 = por %p72, %p73
      %p75 = scmp.ne.s32.totalorder %s67, %s69
      %p76 = scmp.eq.s32.totalorder %s24, 1
      %p77 = por %p75, %p76
      %p78 = scmp.ne.s32.totalorder %s69, %s70
      %p79 = scmp.eq.s32.totalorder %s24, 0
      %p80 = por %p78, %p79
      %p81 = scmp.ne.s32.totalorder %s69, %s70
      %p82 = scmp.eq.s32.totalorder %s25, 1
      %p83 = por %p81, %p82
      %p85 = scmp.ne.s32.totalorder %s70, %s84
      %p86 = scmp.eq.s32.totalorder %s25, 0
      %p87 = por %p85, %p86
      %s89 = sadd.s32 %s88, 1
      %p92 = scmp.eq.s32.totalorder %s19, 1
      %p93 = scmp.ne.s32.totalorder %s88, %s90
      %p94 = scmp.eq.s32.totalorder %s19, 0
      %p95 = por %p93, %p94
      %p96 = scmp.ne.s32.totalorder %s88, %s90
      %p97 = scmp.eq.s32.totalorder %s24, 1
      %p98 = por %p96, %p97
      %p99 = scmp.ne.s32.totalorder %s90, %s91
      %p100 = scmp.eq.s32.totalorder %s24, 0
      %p101 = por %p99, %p100
      %p102 = scmp.ne.s32.totalorder %s90, %s91
      %p103 = scmp.eq.s32.totalorder %s25, 1
      %p104 = por %p102, %p103
      %p106 = scmp.ne.s32.totalorder %s91, %s105
      %p107 = scmp.eq.s32.totalorder %s25, 0
      %p108 = por %p106, %p107
      %s110 = sadd.s32 %s109, 1
      %p113 = scmp.eq.s32.totalorder %s19, 1
      %p114 = scmp.ne.s32.totalorder %s109, %s111
      %p115 = scmp.eq.s32.totalorder %s19, 0
      %p116 = por %p114, %p115
      %p117 = scmp.ne.s32.totalorder %s109, %s111
      %p118 = scmp.eq.s32.totalorder %s24, 1
      %p119 = por %p117, %p118
      %p120 = scmp.ne.s32.totalorder %s111, %s112
      %p121 = scmp.eq.s32.totalorder %s24, 0
      %p122 = por %p120, %p121
      %p123 = scmp.ne.s32.totalorder %s111, %s112
      %p124 = scmp.eq.s32.totalorder %s25, 1
      %p125 = por %p123, %p124
      %p127 = scmp.ne.s32.totalorder %s112, %s126
      %p128 = scmp.eq.s32.totalorder %s25, 0
      %p129 = por %p127, %p128
      %s131 = sadd.s32 %s130, 1
      %p134 = scmp.eq.s32.totalorder %s19, 1
      %p135 = scmp.ne.s32.totalorder %s130, %s132
      %p136 = scmp.eq.s32.totalorder %s19, 0
      %p137 = por %p135, %p136
      %p138 = scmp.ne.s32.totalorder %s130, %s132
      %p139 = scmp.eq.s32.totalorder %s24, 1
      %p140 = por %p138, %p139
      %p141 = scmp.ne.s32.totalorder %s132, %s133
      %p142 = scmp.eq.s32.totalorder %s24, 0
      %p143 = por %p141, %p142
      %p144 = scmp.ne.s32.totalorder %s132, %s133
      %p145 = scmp.eq.s32.totalorder %s25, 1
      %p146 = por %p144, %p145
      %p148 = scmp.ne.s32.totalorder %s133, %s147
      %p149 = scmp.eq.s32.totalorder %s25, 0
      %p150 = por %p148, %p149
      %s151 = ssub.s32 %s27, %s34
      %p152 = scmp.eq.s32.totalorder %s151, 0
      %s154 = sadd.s32 %s153, 1
      %s155 = scalar_select %p152, %s153, %s154
      %p158 = pneg %p152
      %p159 = scmp.eq.s32.totalorder %s19, 1
      %p160 = por %p158, %p159
      %p161 = scmp.ne.s32.totalorder %s153, %s156
      %p162 = scmp.eq.s32.totalorder %s19, 0
      %p163 = por %p161, %p162
      %p164 = scmp.ne.s32.totalorder %s153, %s156
      %p165 = scmp.eq.s32.totalorder %s24, 1
      %p166 = por %p164, %p165
      %p167 = scmp.ne.s32.totalorder %s156, %s157
      %p168 = scmp.eq.s32.totalorder %s24, 0
      %p169 = por %p167, %p168
      %p170 = scmp.ne.s32.totalorder %s156, %s157
      %p171 = scmp.eq.s32.totalorder %s25, 1
      %p172 = por %p170, %p171
      %p174 = scmp.ne.s32.totalorder %s157, %s173
      %p175 = scmp.eq.s32.totalorder %s25, 0
      %p176 = por %p174, %p175
      %s177 = ssub.s32 %s26, %s38
      %s178 = ssub.s32 %s27, %s34
      %s179 = sor.u32 %s177, %s178
      %p180 = scmp.eq.s32.totalorder %s179, 0
      %s182 = sadd.s32 %s181, 1
      %s183 = scalar_select %p180, %s181, %s182
      %p186 = pneg %p180
      %p187 = scmp.eq.s32.totalorder %s19, 1
      %p188 = por %p186, %p187
      %p189 = scmp.ne.s32.totalorder %s181, %s184
      %p190 = scmp.eq.s32.totalorder %s19, 0
      %p191 = por %p189, %p190
      %p192 = scmp.ne.s32.totalorder %s181, %s184
      %p193 = scmp.eq.s32.totalorder %s24, 1
      %p194 = por %p192, %p193
      %p195 = scmp.ne.s32.totalorder %s184, %s185
      %p196 = scmp.eq.s32.totalorder %s24, 0
      %p197 = por %p195, %p196
      %p198 = scmp.ne.s32.totalorder %s184, %s185
      %p199 = scmp.eq.s32.totalorder %s25, 1
      %p200 = por %p198, %p199
      %p202 = scmp.ne.s32.totalorder %s185, %s201
      %p203 = scmp.eq.s32.totalorder %s25, 0
      %p204 = por %p202, %p203
      %p205 = scmp.le.s32.totalorder 1, %s19
      %p206 = scmp.lt.s32.totalorder %s19, 3
      %p207 = pnand %p205, %p206
      %p208 = pneg %p207
      // Predicated region
      $region9: #{tpu_custom_call.1} parent=5 // pred_check
        _
      $region10: #{tpu_custom_call.1} parent=5 // pred_check_branch
        %210 = sbr.rel (%p207) target = $region12
      $region11: #{tpu_custom_call.1} parent=5 // pred_region
        %s211 = ssub.s32 %s19, 1
        // Predicated region
        $region13: #{tpu_custom_call.1} parent=11 // pred_check
          %p212 = pneg %p80
        $region14: #{tpu_custom_call.1} parent=11 // pred_check_branch
          %214 = sbr.rel (%p212) target = $region16
        $region15: #{tpu_custom_call.1} parent=11 // pred_region
          %s216 = ssub.s32 128, 128
          %217 = vsyncadd [#allocation6], %s216
          %s218 = sshll.u32 [#allocation5], 4
          %s219 = int_to_ptr.vmem [resolvable:$true] %s218
          %224 = dma.hbm_to_vmem [thread:$0]  %s1, 128, %s219, [#allocation6], 64, 64, 4
        $region16: #{tpu_custom_call.1} parent=11 // pred_fallthru
          _
        // Predicated region
        $region17: #{tpu_custom_call.1} parent=11 // pred_check
          %p225 = pneg %p101
        $region18: #{tpu_custom_call.1} parent=11 // pred_check_branch
          %227 = sbr.rel (%p225) target = $region20
        $region19: #{tpu_custom_call.1} parent=11 // pred_region
          _
        $region20: #{tpu_custom_call.1} parent=11 // pred_fallthru
          _
        // Predicated region
        $region21: #{tpu_custom_call.1} parent=11 // pred_check
          %p228 = pneg %p122
        $region22: #{tpu_custom_call.1} parent=11 // pred_check_branch
          %230 = sbr.rel (%p228) target = $region24
        $region23: #{tpu_custom_call.1} parent=11 // pred_region
          _
        $region24: #{tpu_custom_call.1} parent=11 // pred_fallthru
          _
        // Predicated region
        $region25: #{tpu_custom_call.1} parent=11 // pred_check
          %p231 = pneg %p143
        $region26: #{tpu_custom_call.1} parent=11 // pred_check_branch
          %233 = sbr.rel (%p231) target = $region28
        $region27: #{tpu_custom_call.1} parent=11 // pred_region
          _
        $region28: #{tpu_custom_call.1} parent=11 // pred_fallthru
          _
        // Predicated region
        $region29: #{tpu_custom_call.1} parent=11 // pred_check
          %p234 = pneg %p169
        $region30: #{tpu_custom_call.1} parent=11 // pred_check_branch
          %236 = sbr.rel (%p234) target = $region32
        $region31: #{tpu_custom_call.1} parent=11 // pred_region
          %s237 = smul.u32 2, %s29
          %s239 = ssub.s32 256, 256
          %240 = vsyncadd [#allocation6], %s239
          %s241 = smul.addr %s237, 128
          %s242 = scalar_lea.hbm %s5, %s241
          %s243 = sshll.u32 [#allocation7], 4
          %s244 = int_to_ptr.vmem [resolvable:$true] %s243
          %249 = dma.hbm_to_vmem [thread:$0]  %s242, 256, %s244, [#allocation6], 128, 128, 8
        $region32: #{tpu_custom_call.1} parent=11 // pred_fallthru
          _
      $region12: #{tpu_custom_call.1} parent=5 // pred_fallthru
        _
      %p250 = scmp.lt.s32.totalorder %s19, 2
      // Predicated region
      $region33: #{tpu_custom_call.1} parent=5 // pred_check
        %p251 = pneg %p250
      $region34: #{tpu_custom_call.1} parent=5 // pred_check_branch
        %253 = sbr.rel (%p251) target = $region36
      $region35: #{tpu_custom_call.1} parent=5 // pred_region
        // Predicated region
        $region37: #{tpu_custom_call.1} parent=35 // pred_check
          %p254 = pneg %p53
        $region38: #{tpu_custom_call.1} parent=35 // pred_check_branch
          %256 = sbr.rel (%p254) target = $region40
        $region39: #{tpu_custom_call.1} parent=35 // pred_region
          %s257 = sand.u32 %s43, 1
          %s258 = scalar_lea.sflag [#allocation3], %s257
          %s259 = sand.u32 %s43, 1
          %s260 = smul.addr %s259, 16
          %s261 = scalar_lea.vmem [#allocation2], %s260
          %s262 = smul.u32 2, %s27
          %s264 = ssub.s32 256, 256
          %265 = vsyncadd %s258, %s264
          %s266 = smul.addr %s26, 2
          %s267 = sadd.s32 %s262, %s266
          %s268 = smul.addr %s267, 128
          %s269 = scalar_lea.hbm %s0, %s268
          %s270 = sshll.u32 %s261, 4
          %s271 = int_to_ptr.vmem [resolvable:$true] %s270
          %276 = dma.hbm_to_vmem [thread:$0]  %s269, 256, %s271, %s258, 128, 128, 8
        $region40: #{tpu_custom_call.1} parent=35 // pred_fallthru
          _
      $region36: #{tpu_custom_call.1} parent=5 // pred_fallthru
        _
      %p277 = scmp.le.s32.totalorder 1, %s19
      %p278 = scmp.lt.s32.totalorder %s19, 3
      %p279 = pnand %p277, %p278
      %p280 = pneg %p279
      // Predicated region
      $region41: #{tpu_custom_call.1} parent=5 // pred_check
        _
      $region42: #{tpu_custom_call.1} parent=5 // pred_check_branch
        %282 = sbr.rel (%p279) target = $region44
      $region43: #{tpu_custom_call.1} parent=5 // pred_region
        %s283 = ssub.s32 %s19, 1
        %s284 = sand.u32 %s46, 1
        %s285 = scalar_lea.sflag [#allocation3], %s284
        %s286 = sand.u32 %s46, 1
        %s287 = smul.addr %s286, 16
        %s288 = scalar_lea.vmem [#allocation2], %s287
        // Predicated region
        $region45: #{tpu_custom_call.1} parent=43 // pred_check
          %p289 = pneg %p59
        $region46: #{tpu_custom_call.1} parent=43 // pred_check_branch
          %291 = sbr.rel (%p289) target = $region48
        $region47: #{tpu_custom_call.1} parent=43 // pred_region
          %292 = dma.done %s285, 256
        $region48: #{tpu_custom_call.1} parent=43 // pred_fallthru
          _
        // Predicated region
        $region49: #{tpu_custom_call.1} parent=43 // pred_check
          %p293 = pneg %p80
        $region50: #{tpu_custom_call.1} parent=43 // pred_check_branch
          %295 = sbr.rel (%p293) target = $region52
        $region51: #{tpu_custom_call.1} parent=43 // pred_region
          %296 = dma.done [#allocation6], 128
        $region52: #{tpu_custom_call.1} parent=43 // pred_fallthru
          _
        // Predicated region
        $region53: #{tpu_custom_call.1} parent=43 // pred_check
          %p297 = pneg %p169
        $region54: #{tpu_custom_call.1} parent=43 // pred_check_branch
          %299 = sbr.rel (%p297) target = $region56
        $region55: #{tpu_custom_call.1} parent=43 // pred_region
          %300 = dma.done [#allocation6], 256
        $region56: #{tpu_custom_call.1} parent=43 // pred_fallthru
          _
        %s301 = sand.u32 %s46, 1
        %s302 = scalar_lea.sflag [#allocation3], %s301
        %s303 = sand.u32 %s46, 1
        %s304 = smul.addr %s303, 16
        %s305 = scalar_lea.vmem [#allocation2], %s304
        %p306 = pneg %p59
        %p307 = pneg %p56
        %p308 = pneg %p80
        %p309 = pneg %p77
        %p310 = pneg %p101
        %p311 = pneg %p98
        %p312 = pneg %p122
        %p313 = pneg %p119
        %p314 = pneg %p143
        %p315 = pneg %p140
        %p316 = pneg %p169
        %p317 = pneg %p166
        %p318 = pneg %p197
        %p319 = pneg %p194
        %s320 = sand.u32 %s184, 1
        %s321 = scalar_lea.sflag [#allocation4], %s320
        %s322 = sand.u32 %s184, 1
        %s323 = smul.addr %s322, 8
        %s324 = scalar_lea.vmem [#allocation8], %s323
        %s325 = smul.u32 2, %s29
        %s326 = smul.u32 2, %s29
        %s327 = smul.u32 2, %s29
        %v329 = vld [vmem:[%s288] sm:$0xff]
        %v330 = vld [vmem:[%s288 + $0x8] sm:$0xff]
        %v331 = vpack.c.bf16 %v330, %v329
        %v332 = vld [vmem:[#allocation5] sm:$0xf]
        %v333 = vld [vmem:[#allocation5 + $0x4] sm:$0xf]
        %v334 = vld [vmem:[%s2] sm:$0x1]
        %v336 = vlaneseq
        %v337 = vshrl.u32 %v336, 7
        %v338 = vsub.s32 0, %v337
        %v339 = vrot.slane %v334, %v338
        %v343 = vunpack.c.l.b16 %v332
        %v344 = vunpack.c.l.b16 %v333
        %v345 = vpack.c.b16 %v344, %v343
        %vm347 = vcmask 130048
        %v349 = vsel %vm347, %v331, 0
        %351 = vmatprep.subr.bf16.mxu0 0
        %352 = vmatpush1.bf16.msra.mxu0 0
        %353 = vmatprep.subr.bf16.mxu0 0
        %354 = vmatpush1.bf16.msra.mxu0 0
        %355 = vmatprep.subr.bf16.mxu0 0
        %356 = vmatpush1.bf16.msra.mxu0 0
        %357 = vmatprep.subr.bf16.mxu0 0
        %358 = vmatpush1.bf16.msra.mxu0 0
        %359 = vmatprep.subr.bf16.mxu0 0
        %360 = vmatpush1.bf16.msra.mxu0 0
        %361 = vmatprep.subr.bf16.mxu0 0
        %362 = vmatpush1.bf16.msra.mxu0 0
        %363 = vmatprep.subr.bf16.mxu0 0
        %364 = vmatpush1.bf16.msra.mxu0 0
        %365 = vmatprep.subr.bf16.mxu0 0
        %366 = vmatpush1.bf16.msra.mxu0 %v345
        %367 = vmatprep.subr.bf16.mxu0 0
        %368 = vmatpush2.bf16.msra.mxu0 0
        %369 = vmatprep.subr.bf16.mxu0 0
        %370 = vmatpush2.bf16.msra.mxu0 0
        %371 = vmatprep.subr.bf16.mxu0 0
        %372 = vmatpush2.bf16.msra.mxu0 0
        %373 = vmatprep.subr.bf16.mxu0 0
        %374 = vmatpush2.bf16.msra.mxu0 0
        %375 = vmatprep.subr.bf16.mxu0 0
        %376 = vmatpush2.bf16.msra.mxu0 0
        %377 = vmatprep.subr.bf16.mxu0 0
        %378 = vmatpush2.bf16.msra.mxu0 0
        %379 = vmatprep.subr.bf16.mxu0 0
        %380 = vmatpush2.bf16.msra.mxu0 0
        %381 = vmatprep.subr.bf16.mxu0 0
        %382 = vmatpush2.bf16.msra.mxu0 0
        %383 = vmatprep.mubr.bf16.mxu0 0
        %384 = vmatmul.mubr.bf16.gmra.mxu0 %v349
        %v385 = vpop.f32.mrf.mxu0
        %v386 = vadd.f32 %v339, %v385
        %v387 = vpop.f32.mrf.mxu0
        %v388 = vpop.f32.mrf.mxu0
        %v389 = vadd.f32 %v339, %v388
        %v390 = vpop.f32.mrf.mxu0
        %391 = vdwg.mxu0
        %v392 = vld [vmem:[%s3] sm:$0x1]
        %v393 = vld [vmem:[%s4] sm:$0x1]
        %vm394 = vcmask 261120
        %v395 = vsel %vm394, %v386, 0.0
        %396 = vadd.xlane.f32.xlu0 %v395
        %v397 = vpop.xlane.xlu0 %396
        %v398 = vsel %vm394, %v389, 0.0
        %399 = vadd.xlane.f32.xlu0 %v398
        %v400 = vpop.xlane.xlu0 %399
        %v401 = vrcp.pop 32.0
        %v402 = vmul.f32 %v397, %v401
        %v403 = vmul.f32 %v400, %v401
        %v404 = vsub.f32 %v386, %v402
        %v405 = vsub.f32 %v389, %v403
        %v406 = vmul.f32 %v404, %v404
        %v407 = vmul.f32 %v405, %v405
        %v408 = vsel %vm394, %v406, 0.0
        %409 = vadd.xlane.f32.xlu0 %v408
        %v410 = vpop.xlane.xlu0 %409
        %v411 = vsel %vm394, %v407, 0.0
        %412 = vadd.xlane.f32.xlu0 %v411
        %v413 = vpop.xlane.xlu0 %412
        %v414 = vmul.f32 %v410, %v401
        %v415 = vmul.f32 %v413, %v401
        %v416 = vadd.f32 %v414, 1e-05
        %v417 = vadd.f32 %v415, 1e-05
        %v418 = vrsqrt.pop %v416
        %v419 = vrsqrt.pop %v417
        %v420 = vmul.f32 %v404, %v418
        %v421 = vmul.f32 %v405, %v419
        %v423 = vlaneseq
        %v424 = vshrl.u32 %v423, 7
        %v425 = vsub.s32 0, %v424
        %v426 = vrot.slane %v392, %v425
        %v428 = vmul.f32 %v420, %v426
        %v429 = vmul.f32 %v421, %v426
        %v431 = vlaneseq
        %v432 = vshrl.u32 %v431, 7
        %v433 = vsub.s32 0, %v432
        %v434 = vrot.slane %v393, %v433
        %v436 = vadd.f32 %v428, %v434
        %v437 = vadd.f32 %v429, %v434
        %v438 = vmax.f32 %v436, 0.0
        %v439 = vmax.f32 %v437, 0.0
        %v440 = vmul.f32 %v438, 5.656854
        %v441 = vmul.f32 %v439, 5.656854
        %v442 = vld [vmem:[#allocation7] sm:$0xff]
        %v443 = vld [vmem:[#allocation7 + $0x8] sm:$0xff]
        %v444 = vadd.f32 %v440, %v442
        %v445 = vadd.f32 %v441, %v443
        %v446 = vpack.c.bf16 %v445, %v444
        %v448 = vunpack.c.l.b16 %v446
        %v449 = vunpack.c.h.b16 %v446
        %v450 = vpack.c.b16 %v448, %v448
        %v451 = vpack.c.b16 %v449, %v449
        %vm454 = vcmask 257024
        %455 = vst.msk [vmem:[%s324] sm:$0xf] %vm454, %v450
        %456 = vst.msk [vmem:[%s324 + $0x4] sm:$0xf] %vm454, %v451
        %s457 = sand.u32 %s184, 1
        %s458 = scalar_lea.sflag [#allocation4], %s457
        %s459 = sand.u32 %s184, 1
        %s460 = smul.addr %s459, 8
        %s461 = scalar_lea.vmem [#allocation8], %s460
        // Predicated region
        $region57: #{tpu_custom_call.1} parent=43 // pred_check
          %p462 = pneg %p194
        $region58: #{tpu_custom_call.1} parent=43 // pred_check_branch
          %464 = sbr.rel (%p462) target = $region60
        $region59: #{tpu_custom_call.1} parent=43 // pred_region
          %s465 = smul.u32 2, %s29
          %s467 = ssub.s32 128, 128
          %468 = vsyncadd %s458, %s467
          %s469 = smul.addr %s28, 2
          %s470 = sadd.s32 %s465, %s469
          %s471 = smul.addr %s470, 64
          %s472 = scalar_lea.hbm %s6, %s471
          %s473 = sshll.u32 %s461, 4
          %s474 = int_to_ptr.vmem [resolvable:$true] %s473
          %479 = dma.vmem_to_hbm [thread:$0]  %s474, 128, %s472, %s458, 64, 64, 4
        $region60: #{tpu_custom_call.1} parent=43 // pred_fallthru
          _
      $region44: #{tpu_custom_call.1} parent=5 // pred_fallthru
        _
      %p480 = scmp.le.s32.totalorder 2, %s19
      // Predicated region
      $region61: #{tpu_custom_call.1} parent=5 // pred_check
        %p481 = pneg %p480
      $region62: #{tpu_custom_call.1} parent=5 // pred_check_branch
        %483 = sbr.rel (%p481) target = $region64
      $region63: #{tpu_custom_call.1} parent=5 // pred_region
        %s484 = ssub.s32 %s19, 2
        // Predicated region
        $region65: #{tpu_custom_call.1} parent=63 // pred_check
          %p485 = pneg %p200
        $region66: #{tpu_custom_call.1} parent=63 // pred_check_branch
          %487 = sbr.rel (%p485) target = $region68
        $region67: #{tpu_custom_call.1} parent=63 // pred_region
          %s488 = sand.u32 %s185, 1
          %s489 = scalar_lea.sflag [#allocation4], %s488
          %s490 = sand.u32 %s185, 1
          %s491 = smul.addr %s490, 8
          %s492 = scalar_lea.vmem [#allocation8], %s491
          %493 = dma.done %s489, 128
        $region68: #{tpu_custom_call.1} parent=63 // pred_fallthru
          _
      $region64: #{tpu_custom_call.1} parent=5 // pred_fallthru
        _
    $region6: #{tpu_custom_call.1} parent=1 // loop_footer
      %s23 = sadd.s32 1, %s19
    $region7: #{tpu_custom_call.1} parent=1 // loop_footer_branch
      %18 = sbr.rel target = $region3
    $region8: #{tpu_custom_call.1} parent=1 // loop_exit
      _
    %494 = vsyncpa [#allocation3], 1
    %s495 = scalar_lea.sflag [#allocation3], 1
    %496 = vsyncpa %s495, 1
    %497 = vsyncpa [#allocation6], 1
    %498 = vsyncpa [#allocation4], 1
    %s499 = scalar_lea.sflag [#allocation4], 1
    %500 = vsyncpa %s499, 1

</llo_original>
